<compile_context>
chip_gen: v7x
topology: tpu7x:2x2x1
jax: 0.10.0
libtpu: 0.0.40
codegen_flags: <defaults>
</compile_context>

<pallas_src>
import functools
import math

import jax
import jax.numpy as jnp
from jax import lax
from jax.experimental import pallas as pl
from jax.experimental.pallas import tpu as pltpu


# ---------------------------------------------------------------------------
# Per-generation sizing helpers
# ---------------------------------------------------------------------------

def _vmem_capacity_bytes() -> int:
    """Physical per-core VMEM; generation-aware even if get_tpu_info fails."""
    try:
        return int(pltpu.get_tpu_info().vmem_capacity_bytes)
    except Exception:
        pass
    try:
        kind = jax.devices()[0].device_kind.lower()
    except Exception:
        kind = ""
    if "v7" in kind:
        return 64 << 20
    if any(g in kind for g in ("v4", "v5", "v6")):
        return 128 << 20
    return 64 << 20  # unknown: conservative


def _pick_tile(seq_len: int, ts_cap: int):
    """Tile size + padded seq length.  Never exceeds ts_cap; awkward lengths
    are handled by padding S (not by falling back to a huge divisor)."""
    if seq_len <= ts_cap:
        return seq_len, seq_len                   # one block = full sequence
    ts = max(8, (ts_cap // 8) * 8)                # multiple of 8 sublanes
    s_pad = ((seq_len + ts - 1) // ts) * ts
    return ts, s_pad


# ---------------------------------------------------------------------------
# Path 1: table resident in VMEM, one-hot MXU gather
# (f32 tables: MXU f32 matmul is multi-pass bf16 -> row copies are accurate
#  but not guaranteed bit-exact vs. the DMA path.)
# ---------------------------------------------------------------------------

def _onehot_kernel(scale, ids_ref, lut_ref, out_ref):
    ts = out_ref.shape[0]
    vocab = lut_ref.shape[0]
    idx = jnp.clip(ids_ref[...], 0, vocab - 1)               # (TS, 1) int32
    iota = lax.broadcasted_iota(jnp.int32, (ts, vocab), 1)    # (TS, V)
    onehot = (iota == idx).astype(lut_ref.dtype)              # (TS, V)
    rows = jnp.dot(onehot, lut_ref[...], preferred_element_type=jnp.float32)
    out_ref[...] = (rows * scale).astype(out_ref.dtype)


def _embed_small_table(ids_pad, lut, ts, vmem_limit, scale):
    B, S_pad = ids_pad.shape
    V, D = lut.shape
    ids3 = ids_pad.astype(jnp.int32).reshape(B, S_pad, 1)
    kernel = functools.partial(_onehot_kernel, scale)

    def build(table_spec):
        return pl.pallas_call(
            kernel,
            out_shape=jax.ShapeDtypeStruct((B, S_pad, D), lut.dtype),
            grid_spec=pltpu.PrefetchScalarGridSpec(
                num_scalar_prefetch=0,
                grid=(B, S_pad // ts),
                in_specs=[
                    pl.BlockSpec((None, ts, 1), lambda b, sc: (b, sc, 0)),
                    table_spec,
                ],
                out_specs=pl.BlockSpec((None, ts, D), lambda b, sc: (b, sc, 0)),
            ),
            compiler_params=pltpu.CompilerParams(
                dimension_semantics=("parallel", "parallel"),
                vmem_limit_bytes=vmem_limit,
            ),
        )

    try:
        # Constant-index-map table: single-buffer it (halves its VMEM footprint).
        spec = pl.BlockSpec((V, D), lambda b, sc: (0, 0),
                            pipeline_mode=pl.Buffered(1))
        return build(spec)(ids3, lut)
    except Exception:
        spec = pl.BlockSpec((V, D), lambda b, sc: (0, 0))
        return build(spec)(ids3, lut)


# ---------------------------------------------------------------------------
# Path 2: table in HBM, chunked deep-pipelined DMA gather into out_ref
# ---------------------------------------------------------------------------

def _gather_kernel(seq_len, chunk_c, n_slots, vocab, scale,
                   ids_ref, lut_hbm, out_ref, sems):
    ts = out_ref.shape[0]
    n_chunks = ts // chunk_c
    b = pl.program_id(0)
    sc = pl.program_id(1)
    base = b * seq_len + sc * ts          # flat offset into ids for this block
    slot_mask = n_slots - 1               # n_slots is a power of two

    def issue(chunk, slot):
        off = chunk * chunk_c
        for j in range(chunk_c):          # chunk_c is small & static
            tok = ids_ref[base + off + j]
            tok = jnp.minimum(jnp.maximum(tok, 0), vocab - 1)   # clamp OOB ids
            pltpu.make_async_copy(
                lut_hbm.at[pl.ds(tok, 1), :],
                out_ref.at[pl.ds(off + j, 1), :],
                sems.at[slot],            # all rows of a chunk -> one semaphore
            ).start()

    def wait(chunk, slot):
        off = chunk * chunk_c
        # Single accumulated wait for all chunk_c row copies of this slot.
        # The descriptor only sets the byte count / sem; src rows are a dummy
        # constant slice (no id re-reads, no per-row waits).
        pltpu.make_async_copy(
            lut_hbm.at[pl.ds(0, chunk_c), :],
            out_ref.at[pl.ds(off, chunk_c), :],
            sems.at[slot],
        ).wait()

    lookahead = n_slots - 1
    for c0 in range(lookahead):           # static prologue (n_slots <= n_chunks)
        issue(c0, c0 & slot_mask)

    @pl.loop(0, n_chunks)
    def _(c):
        slot = c & slot_mask

        # Keep the DMA queue deep: issue chunk c+lookahead before waiting on c
        # (scalar id reads stay ahead of any .wait()).
        @pl.when(c + lookahead < n_chunks)
        def _():
            issue(c + lookahead, (c + lookahead) & slot_mask)

        wait(c, slot)
        off = pl.multiple_of(c * chunk_c, chunk_c)
        rows = pl.ds(off, chunk_c)
        # Scale in place; VPU work is filler under the DMA-bound phase.
        out_ref[rows, :] = (
            out_ref[rows, :].astype(jnp.float32) * scale
        ).astype(out_ref.dtype)


def _embed_hbm_gather(ids_pad, lut, ts, vmem_limit, scale):
    B, S_pad = ids_pad.shape
    V, D = lut.shape

    # Rows per accumulated wait (dummy-src wait slices lut rows [0, chunk_c)).
    chunk_c = None
    for cand in (64, 32, 16, 8):
        if ts % cand == 0 and cand <= V:
            chunk_c = cand
            break
    if chunk_c is None:
        chunk_c = ts if ts <= V else 1
    n_chunks = ts // chunk_c
    n_slots = 4 if n_chunks >= 4 else (2 if n_chunks >= 2 else 1)

    ids_flat = ids_pad.astype(jnp.int32).reshape(-1)
    kernel = functools.partial(_gather_kernel, S_pad, chunk_c, n_slots, V, scale)
    return pl.pallas_call(
        kernel,
        out_shape=jax.ShapeDtypeStruct((B, S_pad, D), lut.dtype),
        grid_spec=pltpu.PrefetchScalarGridSpec(
            num_scalar_prefetch=1,                 # flat ids -> SMEM
            grid=(B, S_pad // ts),
            in_specs=[pl.BlockSpec(memory_space=pl.ANY)],   # table stays in HBM
            out_specs=pl.BlockSpec((None, ts, D), lambda b, sc, ids: (b, sc, 0)),
            scratch_shapes=[pltpu.SemaphoreType.DMA((n_slots,))],
        ),
        compiler_params=pltpu.CompilerParams(
            dimension_semantics=("parallel", "parallel"),
            vmem_limit_bytes=vmem_limit,
        ),
    )(ids_flat, lut)


# ---------------------------------------------------------------------------
# Public entry point
# ---------------------------------------------------------------------------

def embeddings_forward(ids: jax.Array, lut: jax.Array, *,
                       force_hbm_gather: bool = False) -> jax.Array:
    """ids: (B, S) int, lut: (V, D) float -> (B, S, D) = lut[ids] * sqrt(D).

    Out-of-range ids are clamped to [0, V-1] (PyTorch would raise).
    """
    B, S = ids.shape
    V, D = lut.shape
    itemsize = jnp.dtype(lut.dtype).itemsize
    scale = math.sqrt(float(D))                    # sqrt of the *unpadded* d_model

    # Lane-dense last dim: pad D to a multiple of 128 (no-op for real d_model).
    D_pad = ((D + 127) // 128) * 128
    lut_p = lut if D_pad == D else jnp.pad(lut, ((0, 0), (0, D_pad - D)))
    row_bytes = D_pad * itemsize
    table_bytes = V * D_pad * itemsize

    cap = _vmem_capacity_bytes()
    vmem_limit = int(min(max(cap * 3 // 4, 32 << 20), 100 << 20))

    # Resident-table path whenever the table fits a generous budget and rows
    # are small enough that per-row DMAs would be pure descriptor overhead.
    resident_cap = min(vmem_limit // 4, 16 << 20)
    use_resident = (not force_hbm_gather
                    and table_bytes <= resident_cap
                    and row_bytes <= 2048)

    if use_resident:
        budget = max(vmem_limit - 2 * table_bytes, 4 << 20)
        per_tok = 3 * V * itemsize + 2 * row_bytes + 4 * D_pad
        ts_cap = int(max(8, min(budget // (3 * max(per_tok, 1)), 1024)))
    else:
        # Gather path: only VMEM consumer is the double-buffered output block.
        ts_cap = int(max(8, min(vmem_limit // (3 * row_bytes), 4096)))

    ts, s_pad = _pick_tile(S, ts_cap)
    ids_pad = ids.astype(jnp.int32)
    if s_pad != S:
        ids_pad = jnp.pad(ids_pad, ((0, 0), (0, s_pad - S)))

    if use_resident:
        out = _embed_small_table(ids_pad, lut_p, ts, vmem_limit, scale)
    else:
        out = _embed_hbm_gather(ids_pad, lut_p, ts, vmem_limit, scale)

    if s_pad != S:
        out = out[:, :S, :]
    if D_pad != D:
        out = out[:, :, :D]
    return out


if __name__ == "__main__":
    key = jax.random.PRNGKey(0)
    k_lut, k_ids = jax.random.split(key)

    vocab_size = 50
    d_model = 32
    batch, seq = 2, 8

    # Deterministic parameter init (nn.Embedding weight ~ N(0, 1)).
    lut = jax.random.normal(k_lut, (vocab_size, d_model), dtype=jnp.float32)
    ids = jax.random.randint(k_ids, (batch, seq), 0, vocab_size, dtype=jnp.int32)

    ref = lut[ids] * math.sqrt(float(d_model))

    # Resident-table path (table in VMEM, one-hot MXU gather).
    out_small = jax.block_until_ready(embeddings_forward(ids, lut))
    assert out_small.shape == (batch, seq, d_model)
    assert out_small.dtype == jnp.float32
    assert jnp.allclose(out_small, ref, atol=1e-5, rtol=1e-5), "vmem path mismatch"

    # HBM-gather path (deep-pipelined row DMAs with accumulated waits), forced
    # so both code paths are exercised on the small test shape.
    out_gather = jax.block_until_ready(
        embeddings_forward(ids, lut, force_hbm_gather=True))
    assert jnp.allclose(out_gather, ref, atol=1e-5, rtol=1e-5), "gather path mismatch"

    print("KERNEL_OK")
</pallas_src>

<mosaic_0001>
module attributes {stable_mosaic.version = 11 : i64} {
  func.func @_onehot_kernel(%arg0: i32, %arg1: i32, %arg2: memref<1x8x1xi32, #tpu.memory_space<vmem>>, %arg3: memref<50x128xf32, #tpu.memory_space<vmem>>, %arg4: memref<1x8x128xf32, #tpu.memory_space<vmem>>) attributes {dimension_semantics = [#tpu.dimension_semantics<parallel>, #tpu.dimension_semantics<parallel>], iteration_bounds = array<i64: 2, 1>, scalar_prefetch = 0 : i64, scratch_operands = 0 : i64, tpu.core_type = #tpu.core_type<tc>, window_params = [{transform_indices = @transform_0, window_bounds = array<i64: 1, 8, 1>}, {pipeline_mode = #tpu.pipeline_mode<synchronous>, transform_indices = @transform_1, window_bounds = array<i64: 50, 128>}, {transform_indices = @transform_2, window_bounds = array<i64: 1, 8, 128>}]} {
    %c0 = arith.constant 0 : index
    %c0_0 = arith.constant 0 : index
    %c0_1 = arith.constant 0 : index
    %0 = vector.load %arg2[%c0, %c0_0, %c0_1] : memref<1x8x1xi32, #tpu.memory_space<vmem>>, vector<1x8x1xi32>
    %1 = vector.shape_cast %0 : vector<1x8x1xi32> to vector<8x1xi32>
    %c0_i32 = arith.constant 0 : i32
    %c49_i32 = arith.constant 49 : i32
    %2 = vector.broadcast %c0_i32 : i32 to vector<8x1xi32>
    %3 = arith.maxsi %2, %1 : vector<8x1xi32>
    %4 = vector.broadcast %c49_i32 : i32 to vector<8x1xi32>
    %5 = arith.minsi %4, %3 : vector<8x1xi32>
    %6 = tpu.iota {dimensions = array<i32: 1>} : vector<8x50xi32>
    %7 = vector.broadcast %5 : vector<8x1xi32> to vector<8x50xi32>
    %8 = arith.cmpi eq, %6, %7 : vector<8x50xi32>
    %9 = arith.extui %8 : vector<8x50xi1> to vector<8x50xi32>
    %10 = arith.sitofp %9 : vector<8x50xi32> to vector<8x50xf32>
    %c0_2 = arith.constant 0 : index
    %c0_3 = arith.constant 0 : index
    %11 = vector.load %arg3[%c0_2, %c0_3] : memref<50x128xf32, #tpu.memory_space<vmem>>, vector<50x128xf32>
    %cst = arith.constant dense<0.000000e+00> : vector<8x128xf32>
    %12 = tpu.matmul %10, %11, %cst {dimension_numbers = #tpu.dot_dimension_numbers<[1], [0], [0], [1], [0, 0, 1, 1], [], []>} : vector<8x50xf32>, vector<50x128xf32>, vector<8x128xf32> -> vector<8x128xf32>
    %cst_4 = arith.constant 5.65685415 : f32
    %13 = vector.broadcast %cst_4 : f32 to vector<8x128xf32>
    %14 = arith.mulf %12, %13 : vector<8x128xf32>
    %c0_5 = arith.constant 0 : index
    %c0_6 = arith.constant 0 : index
    %c0_7 = arith.constant 0 : index
    %15 = vector.load %arg4[%c0_5, %c0_6, %c0_7] : memref<1x8x128xf32, #tpu.memory_space<vmem>>, vector<1x8x128xf32>
    %16 = vector.shape_cast %15 : vector<1x8x128xf32> to vector<8x128xf32>
    %17 = vector.shape_cast %14 : vector<8x128xf32> to vector<1x8x128xf32>
    tpu.vector_store %arg4[%c0_5, %c0_6, %c0_7], %17 {strides = array<i32>} : memref<1x8x128xf32, #tpu.memory_space<vmem>>, vector<1x8x128xf32>,
    return
  }
  func.func @transform_0(%arg0: i32, %arg1: i32) -> (i32, i32, i32) {
    %c0_i32 = arith.constant 0 : i32
    %c0_i32_0 = arith.constant 0 : i32
    return %arg0, %arg1, %c0_i32 : i32, i32, i32
  }
  func.func @transform_1(%arg0: i32, %arg1: i32) -> (i32, i32) {
    %c0_i32 = arith.constant 0 : i32
    %c0_i32_0 = arith.constant 0 : i32
    %c0_i32_1 = arith.constant 0 : i32
    return %c0_i32, %c0_i32_0 : i32, i32
  }
  func.func @transform_2(%arg0: i32, %arg1: i32) -> (i32, i32, i32) {
    %c0_i32 = arith.constant 0 : i32
    %c0_i32_0 = arith.constant 0 : i32
    return %arg0, %arg1, %c0_i32 : i32, i32, i32
  }
}

module attributes {stable_mosaic.version = 11 : i64} {
  func.func @_onehot_kernel(%arg0: i32, %arg1: i32, %arg2: memref<1x8x1xi32, #tpu.memory_space<vmem>>, %arg3: memref<50x128xf32, #tpu.memory_space<vmem>>, %arg4: memref<1x8x128xf32, #tpu.memory_space<vmem>>) attributes {dimension_semantics = [#tpu.dimension_semantics<parallel>, #tpu.dimension_semantics<parallel>], iteration_bounds = array<i64: 2, 1>, scalar_prefetch = 0 : i64, scratch_operands = 0 : i64, tpu.core_type = #tpu.core_type<tc>, window_params = [{transform_indices = @transform_0, window_bounds = array<i64: 1, 8, 1>}, {pipeline_mode = #tpu.pipeline_mode<synchronous>, transform_indices = @transform_1, window_bounds = array<i64: 50, 128>}, {transform_indices = @transform_2, window_bounds = array<i64: 1, 8, 128>}]} {
    %c0 = arith.constant 0 : index
    %c0_0 = arith.constant 0 : index
    %c0_1 = arith.constant 0 : index
    %0 = vector.load %arg2[%c0, %c0_0, %c0_1] : memref<1x8x1xi32, #tpu.memory_space<vmem>>, vector<1x8x1xi32>
    %1 = vector.shape_cast %0 : vector<1x8x1xi32> to vector<8x1xi32>
    %c0_i32 = arith.constant 0 : i32
    %c49_i32 = arith.constant 49 : i32
    %2 = vector.broadcast %c0_i32 : i32 to vector<8x1xi32>
    %3 = arith.maxsi %2, %1 : vector<8x1xi32>
    %4 = vector.broadcast %c49_i32 : i32 to vector<8x1xi32>
    %5 = arith.minsi %4, %3 : vector<8x1xi32>
    %6 = tpu.iota {dimensions = array<i32: 1>} : vector<8x50xi32>
    %7 = vector.broadcast %5 : vector<8x1xi32> to vector<8x50xi32>
    %8 = arith.cmpi eq, %6, %7 : vector<8x50xi32>
    %9 = arith.extui %8 : vector<8x50xi1> to vector<8x50xi32>
    %10 = arith.sitofp %9 : vector<8x50xi32> to vector<8x50xf32>
    %c0_2 = arith.constant 0 : index
    %c0_3 = arith.constant 0 : index
    %11 = vector.load %arg3[%c0_2, %c0_3] : memref<50x128xf32, #tpu.memory_space<vmem>>, vector<50x128xf32>
    %cst = arith.constant dense<0.000000e+00> : vector<8x128xf32>
    %12 = tpu.matmul %10, %11, %cst {dimension_numbers = #tpu.dot_dimension_numbers<[1], [0], [0], [1], [0, 0, 1, 1], [], []>} : vector<8x50xf32>, vector<50x128xf32>, vector<8x128xf32> -> vector<8x128xf32>
    %cst_4 = arith.constant 5.65685415 : f32
    %13 = vector.broadcast %cst_4 : f32 to vector<8x128xf32>
    %14 = arith.mulf %12, %13 : vector<8x128xf32>
    %c0_5 = arith.constant 0 : index
    %c0_6 = arith.constant 0 : index
    %c0_7 = arith.constant 0 : index
    %15 = vector.load %arg4[%c0_5, %c0_6, %c0_7] : memref<1x8x128xf32, #tpu.memory_space<vmem>>, vector<1x8x128xf32>
    %16 = vector.shape_cast %15 : vector<1x8x128xf32> to vector<8x128xf32>
    %17 = vector.shape_cast %14 : vector<8x128xf32> to vector<1x8x128xf32>
    tpu.vector_store %arg4[%c0_5, %c0_6, %c0_7], %17 {strides = array<i32>} : memref<1x8x128xf32, #tpu.memory_space<vmem>>, vector<1x8x128xf32>,
    return
  }
  func.func @transform_0(%arg0: i32, %arg1: i32) -> (i32, i32, i32) {
    %c0_i32 = arith.constant 0 : i32
    %c0_i32_0 = arith.constant 0 : i32
    return %arg0, %arg1, %c0_i32 : i32, i32, i32
  }
  func.func @transform_1(%arg0: i32, %arg1: i32) -> (i32, i32) {
    %c0_i32 = arith.constant 0 : i32
    %c0_i32_0 = arith.constant 0 : i32
    %c0_i32_1 = arith.constant 0 : i32
    return %c0_i32, %c0_i32_0 : i32, i32
  }
  func.func @transform_2(%arg0: i32, %arg1: i32) -> (i32, i32, i32) {
    %c0_i32 = arith.constant 0 : i32
    %c0_i32_0 = arith.constant 0 : i32
    return %arg0, %arg1, %c0_i32 : i32, i32, i32
  }
}

</mosaic_0001>

<llo_original>
// kernel: tpu_custom_call.1
$region0: #{tpu_custom_call.1}
  #allocation0 [shape = 'u32[]', space=smem, size = 0x4, offset = 0x4, fixed_abs, tag = 'smem constant byte address 0x4 - core index']
  #allocation1 [shape = 'u32[144,128]{1,0:T(1,128)}', space=vmem, size = 0x12000, scoped, tag = 'internal scratch']
  %s0 = inlined_call_operand.vmem [shape: s32[2,8,1], index: 0, kind: input, shape index: {}]
  %s1 = inlined_call_operand.hbm [shape: f32[50,128], index: 1, kind: input, shape index: {}]
  %s2 = inlined_call_operand.hbm [shape: f32[2,8,128], index: 2, kind: output, shape index: {}]
  %s3 = sld [smem:[#allocation0]]
  $region45: #{tpu_custom_call.1} parent=0
    _
  %s5 = ssub.s32 1, %s3
  %s6 = scalar_select 0, %s5, %s3
  $region1: #{tpu_custom_call.1} parent=0
    #allocation2 [shape = 'u8[28672]{0}', space=vmem, size = 0x7000, scoped, tag = 'input window, operand 1, single buffered']
    #allocation3 [shape = 's32[2]{0}', space=sflag, size = 0x8, scoped, tag = 'scoped memory for tpu_custom_call.1']
    #allocation4 [shape = 's32[2]{0}', space=sflag, size = 0x8, scoped, tag = 'scoped memory for tpu_custom_call.1']
    #allocation5 [shape = 'u8[8192]{0}', space=vmem, size = 0x2000, scoped, tag = 'output window, operand 0']
    %7 = vsyncpa [#allocation3], 0
    %8 = vsyncpa [#allocation4], 0
    %s9 = scalar_lea.sflag [#allocation4], 1
    %10 = vsyncpa %s9, 0
    loop: start=0, step=1, limit=4
    $region2: #{tpu_custom_call.1} parent=1 // loop_pre_header
      _
    $region3: #{tpu_custom_call.1} parent=1 // loop_header
      %s12 = sphi 0, %s16
      %p13 = scmp.ge.s32.totalorder %s12, 4
      %s19 = sphi 0, %s31
      %s20 = sphi 0, %s27
      %s21 = sphi 0, %s19
      %s22 = sphi 0, %s20
      %s23 = sphi 0, %s21
      %s24 = sphi 0, %s22
      %s36 = sphi 0, %s38
      %s39 = sphi 0, %s36
      %s40 = sphi 0, %s39
      %s56 = sphi 0, %s40
      %s60 = sphi 0, %s60
      %s62 = sphi 0, %s60
      %s63 = sphi 0, %s62
      %s77 = sphi 0, %s63
      %s85 = sphi 0, %s87
      %s88 = sphi 0, %s85
      %s89 = sphi 0, %s88
      %s105 = sphi 0, %s89
    $region4: #{tpu_custom_call.1} parent=1 // loop_header_branch
      %15 = sbr.rel (%p13) target = $region8
    $region5: #{tpu_custom_call.1} parent=1 // loop_body
      %s17 = ssub.s32 %s12, 1
      %s18 = ssub.s32 %s12, 2
      %s25 = sadd.s32 1, %s20
      %p26 = scmp.ge.s32.totalorder %s25, 1
      %s27 = scalar_select %p26, 0, %s25
      %s28 = sadd.s32 1, %s19
      %s29 = scalar_select %p26, %s28, %s19
      %p30 = scmp.ge.s32.totalorder %s29, 2
      %s31 = scalar_select %p30, 0, %s29
      %s32 = ssub.s32 %s19, %s31
      %s33 = ssub.s32 %s20, %s27
      %s34 = sor.u32 %s32, %s33
      %p35 = scmp.eq.s32.totalorder %s34, 0
      %s37 = sadd.s32 %s36, 1
      %s38 = scalar_select %p35, %s36, %s37
      %p41 = pneg %p35
      %p42 = scmp.eq.s32.totalorder %s12, 1
      %p43 = por %p41, %p42
      %p44 = scmp.ne.s32.totalorder %s36, %s39
      %p45 = scmp.eq.s32.totalorder %s12, 0
      %p46 = por %p44, %p45
      %p47 = scmp.ne.s32.totalorder %s36, %s39
      %p48 = scmp.eq.s32.totalorder %s17, 1
      %p49 = por %p47, %p48
      %p50 = scmp.ne.s32.totalorder %s39, %s40
      %p51 = scmp.eq.s32.totalorder %s17, 0
      %p52 = por %p50, %p51
      %p53 = scmp.ne.s32.totalorder %s39, %s40
      %p54 = scmp.eq.s32.totalorder %s18, 1
      %p55 = por %p53, %p54
      %p57 = scmp.ne.s32.totalorder %s40, %s56
      %p58 = scmp.eq.s32.totalorder %s18, 0
      %p59 = por %p57, %p58
      %s61 = sadd.s32 %s60, 1
      %p64 = scmp.eq.s32.totalorder %s12, 1
      %p65 = scmp.ne.s32.totalorder %s60, %s62
      %p66 = scmp.eq.s32.totalorder %s12, 0
      %p67 = por %p65, %p66
      %p68 = scmp.ne.s32.totalorder %s60, %s62
      %p69 = scmp.eq.s32.totalorder %s17, 1
      %p70 = por %p68, %p69
      %p71 = scmp.ne.s32.totalorder %s62, %s63
      %p72 = scmp.eq.s32.totalorder %s17, 0
      %p73 = por %p71, %p72
      %p74 = scmp.ne.s32.totalorder %s62, %s63
      %p75 = scmp.eq.s32.totalorder %s18, 1
      %p76 = por %p74, %p75
      %p78 = scmp.ne.s32.totalorder %s63, %s77
      %p79 = scmp.eq.s32.totalorder %s18, 0
      %p80 = por %p78, %p79
      %s81 = ssub.s32 %s19, %s31
      %s82 = ssub.s32 %s20, %s27
      %s83 = sor.u32 %s81, %s82
      %p84 = scmp.eq.s32.totalorder %s83, 0
      %s86 = sadd.s32 %s85, 1
      %s87 = scalar_select %p84, %s85, %s86
      %p90 = pneg %p84
      %p91 = scmp.eq.s32.totalorder %s12, 1
      %p92 = por %p90, %p91
      %p93 = scmp.ne.s32.totalorder %s85, %s88
      %p94 = scmp.eq.s32.totalorder %s12, 0
      %p95 = por %p93, %p94
      %p96 = scmp.ne.s32.totalorder %s85, %s88
      %p97 = scmp.eq.s32.totalorder %s17, 1
      %p98 = por %p96, %p97
      %p99 = scmp.ne.s32.totalorder %s88, %s89
      %p100 = scmp.eq.s32.totalorder %s17, 0
      %p101 = por %p99, %p100
      %p102 = scmp.ne.s32.totalorder %s88, %s89
      %p103 = scmp.eq.s32.totalorder %s18, 1
      %p104 = por %p102, %p103
      %p106 = scmp.ne.s32.totalorder %s89, %s105
      %p107 = scmp.eq.s32.totalorder %s18, 0
      %p108 = por %p106, %p107
      %p109 = scmp.le.s32.totalorder 1, %s12
      %p110 = scmp.lt.s32.totalorder %s12, 3
      %p111 = pnand %p109, %p110
      %p112 = pneg %p111
      // Predicated region
      $region9: #{tpu_custom_call.1} parent=5 // pred_check
        _
      $region10: #{tpu_custom_call.1} parent=5 // pred_check_branch
        %114 = sbr.rel (%p111) target = $region12
      $region11: #{tpu_custom_call.1} parent=5 // pred_region
        %s115 = ssub.s32 %s12, 1
        // Predicated region
        $region13: #{tpu_custom_call.1} parent=11 // pred_check
          %p116 = pneg %p73
        $region14: #{tpu_custom_call.1} parent=11 // pred_check_branch
          %118 = sbr.rel (%p116) target = $region16
        $region15: #{tpu_custom_call.1} parent=11 // pred_region
          %s120 = ssub.s32 896, 896
          %121 = vsyncadd [#allocation3], %s120
          %s122 = sshll.u32 [#allocation2], 4
          %s123 = int_to_ptr.vmem [resolvable:$true] %s122
          %128 = dma.hbm_to_vmem [thread:$0]  %s1, 896, %s123, [#allocation3], 128, 128, 8
        $region16: #{tpu_custom_call.1} parent=11 // pred_fallthru
          _
      $region12: #{tpu_custom_call.1} parent=5 // pred_fallthru
        _
      %p129 = scmp.lt.s32.totalorder %s12, 2
      // Predicated region
      $region17: #{tpu_custom_call.1} parent=5 // pred_check
        %p130 = pneg %p129
      $region18: #{tpu_custom_call.1} parent=5 // pred_check_branch
        %132 = sbr.rel (%p130) target = $region20
      $region19: #{tpu_custom_call.1} parent=5 // pred_region
        // Predicated region
        $region21: #{tpu_custom_call.1} parent=19 // pred_check
          %p133 = pneg %p46
        $region22: #{tpu_custom_call.1} parent=19 // pred_check_branch
          %135 = sbr.rel (%p133) target = $region24
        $region23: #{tpu_custom_call.1} parent=19 // pred_region
          %p136 = scmp.lt.s32.totalorder %s19, 1
          %s137 = scalar_select %p136, %s19, 1
          %p138 = scmp.lt.s32.totalorder %s20, 0
          %s139 = scalar_select %p138, %s20, 0
          %s140 = sadd.s32 %s139, %s137
          %s141 = smul.addr %s140, 8
          %s142 = scalar_lea.vmem %s0, %s141
        $region24: #{tpu_custom_call.1} parent=19 // pred_fallthru
          _
      $region20: #{tpu_custom_call.1} parent=5 // pred_fallthru
        _
      %p143 = scmp.le.s32.totalorder 1, %s12
      %p144 = scmp.lt.s32.totalorder %s12, 3
      %p145 = pnand %p143, %p144
      %p146 = pneg %p145
      // Predicated region
      $region25: #{tpu_custom_call.1} parent=5 // pred_check
        _
      $region26: #{tpu_custom_call.1} parent=5 // pred_check_branch
        %148 = sbr.rel (%p145) target = $region28
      $region27: #{tpu_custom_call.1} parent=5 // pred_region
        %s149 = ssub.s32 %s12, 1
        // Predicated region
        $region29: #{tpu_custom_call.1} parent=27 // pred_check
          %p150 = pneg %p73
        $region30: #{tpu_custom_call.1} parent=27 // pred_check_branch
          %152 = sbr.rel (%p150) target = $region32
        $region31: #{tpu_custom_call.1} parent=27 // pred_region
          %153 = dma.done [#allocation3], 896
        $region32: #{tpu_custom_call.1} parent=27 // pred_fallthru
          _
        %p154 = scmp.lt.s32.totalorder %s21, 1
        %s155 = scalar_select %p154, %s21, 1
        %p156 = scmp.lt.s32.totalorder %s22, 0
        %s157 = scalar_select %p156, %s22, 0
        %s158 = sadd.s32 %s157, %s155
        %s159 = smul.addr %s158, 8
        %s160 = scalar_lea.vmem %s0, %s159
        %p161 = pneg %p52
        %p162 = pneg %p49
        %p163 = pneg %p73
        %p164 = pneg %p70
        %p165 = pneg %p101
        %p166 = pneg %p98
        %s167 = sand.u32 %s88, 1
        %s168 = scalar_lea.sflag [#allocation4], %s167
        %s169 = sand.u32 %s88, 1
        %s170 = smul.addr %s169, 8
        %s171 = scalar_lea.vmem [#allocation5], %s170
        %p172 = scmp.lt.s32.totalorder %s21, 1
        %s173 = scalar_select %p172, %s21, 1
        %p174 = scmp.lt.s32.totalorder %s22, 0
        %s175 = scalar_select %p174, %s22, 0
        %s176 = sadd.s32 %s175, %s173
        %s177 = smul.addr %s176, 8
        %s178 = scalar_lea.vmem %s0, %s177
        %v179 = vld [vmem:[%s178] sm:$0xff]
        %vm180 = vcmp.gt.s32.totalorder %v179, 0
        %v181 = vsel %vm180, %v179, 0
        %vm182 = vcmp.lt.s32.totalorder %v181, 49
        %v183 = vsel %vm182, %v181, 49
        %v184 = vlaneseq
        %v185 = vand.u32 %v184, 127
        %186 = vset.pattern.permute.xlu0 0
        %187 = vperm.xlu0 %186, %v183
        %v188 = vpop.permute.xlu0 %187
        %vm189 = vcmp.eq.s32.totalorder %v185, %v188
        %v190 = vsel %vm189, 1, 0
        %v191 = vcvt.s32.f32 %v190
        %v192 = vld [vmem:[#allocation2] sm:$0xff]
        %v193 = vld [vmem:[#allocation2 + $0x8] sm:$0xff]
        %v194 = vld [vmem:[#allocation2 + $0x10] sm:$0xff]
        %v195 = vld [vmem:[#allocation2 + $0x18] sm:$0xff]
        %v196 = vld [vmem:[#allocation2 + $0x20] sm:$0xff]
        %v197 = vld [vmem:[#allocation2 + $0x28] sm:$0xff]
        %v198 = vld [vmem:[#allocation2 + $0x30] sm:$0x3]
        %vm199 = vcmask 408576
        %v201 = vsel %vm199, %v191, 0
        %vm203 = vcmask 1041408
        %v205 = vsel %vm203, %v198, 0
        %207 = vmatprep.subr.mxu0 0.0
        %208 = vmatpush1.msra.mxu0 %v192
        %209 = vmatprep.subr.mxu0 0.0
        %210 = vmatpush1.msra.mxu0 %v193
        %211 = vmatprep.subr.mxu0 0.0
        %212 = vmatpush1.msra.mxu0 %v194
        %213 = vmatprep.subr.mxu0 0.0
        %214 = vmatpush1.msra.mxu0 %v195
        %215 = vmatprep.subr.mxu0 0.0
        %216 = vmatpush1.msra.mxu0 %v196
        %217 = vmatprep.subr.mxu0 0.0
        %218 = vmatpush1.msra.mxu0 %v197
        %219 = vmatprep.subr.mxu0 0.0
        %220 = vmatpush1.msra.mxu0 %v205
        %221 = vmatprep.subr.mxu0 0.0
        %222 = vmatpush1.msra.mxu0 0.0
        %223 = vmatprep.subr.mxu0 0.0
        %224 = vmatpush1.msra.mxu0 0.0
        %225 = vmatprep.subr.mxu0 0.0
        %226 = vmatpush1.msra.mxu0 0.0
        %227 = vmatprep.subr.mxu0 0.0
        %228 = vmatpush1.msra.mxu0 0.0
        %229 = vmatprep.subr.mxu0 0.0
        %230 = vmatpush1.msra.mxu0 0.0
        %231 = vmatprep.subr.mxu0 0.0
        %232 = vmatpush1.msra.mxu0 0.0
        %233 = vmatprep.subr.mxu0 0.0
        %234 = vmatpush1.msra.mxu0 0.0
        %235 = vmatprep.subr.mxu0 0.0
        %236 = vmatpush1.msra.mxu0 0.0
        %237 = vmatprep.subr.mxu0 0.0
        %238 = vmatpush1.msra.mxu0 0.0
        %239 = vmatprep.subr.mxu0 0.0
        %240 = vmatpush1.msra.mxu0 0.0
        %241 = vmatprep.subr.mxu0 0.0
        %242 = vmatpush1.msra.mxu0 0.0
        %243 = vmatprep.subr.mxu0 0.0
        %244 = vmatpush1.msra.mxu0 0.0
        %245 = vmatprep.subr.mxu0 0.0
        %246 = vmatpush1.msra.mxu0 0.0
        %247 = vmatprep.subr.mxu0 0.0
        %248 = vmatpush1.msra.mxu0 0.0
        %249 = vmatprep.subr.mxu0 0.0
        %250 = vmatpush1.msra.mxu0 0.0
        %251 = vmatprep.subr.mxu0 0.0
        %252 = vmatpush1.msra.mxu0 0.0
        %253 = vmatprep.subr.mxu0 0.0
        %254 = vmatpush1.msra.mxu0 0.0
        %255 = vmatprep.subr.mxu0 0.0
        %256 = vmatpush1.msra.mxu0 0.0
        %257 = vmatprep.subr.mxu0 0.0
        %258 = vmatpush1.msra.mxu0 0.0
        %259 = vmatprep.subr.mxu0 0.0
        %260 = vmatpush1.msra.mxu0 0.0
        %261 = vmatprep.subr.mxu0 0.0
        %262 = vmatpush1.msra.mxu0 0.0
        %263 = vmatprep.subr.mxu0 0.0
        %264 = vmatpush1.msra.mxu0 0.0
        %265 = vmatprep.subr.mxu0 0.0
        %266 = vmatpush1.msra.mxu0 0.0
        %267 = vmatprep.subr.mxu0 0.0
        %268 = vmatpush1.msra.mxu0 0.0
        %269 = vmatprep.subr.mxu0 0.0
        %270 = vmatpush1.msra.mxu0 0.0
        %271 = vmatprep.mubr.f32.mxu0 0.0
        %272 = vmatmul.mubr.f32.gmra.mrb[0].mxu0 %v201
        %v273 = vpop.f32.mrb[0].mxu0
        %v274 = vadd.f32 0.0, %v273
        %v275 = vpop.f32.mrb[0].mxu0
        %276 = vdwg.mxu0
        %v277 = vmul.f32 %v274, 5.656854
        %278 = vst [vmem:[%s171] sm:$0xff] %v277
        %s279 = sand.u32 %s88, 1
        %s280 = scalar_lea.sflag [#allocation4], %s279
        %s281 = sand.u32 %s88, 1
        %s282 = smul.addr %s281, 8
        %s283 = scalar_lea.vmem [#allocation5], %s282
        // Predicated region
        $region33: #{tpu_custom_call.1} parent=27 // pred_check
          %p284 = pneg %p98
        $region34: #{tpu_custom_call.1} parent=27 // pred_check_branch
          %286 = sbr.rel (%p284) target = $region36
        $region35: #{tpu_custom_call.1} parent=27 // pred_region
          %s288 = ssub.s32 128, 128
          %289 = vsyncadd %s280, %s288
          %s290 = sadd.s32 %s22, %s21
          %s291 = smul.addr %s290, 128
          %s292 = scalar_lea.hbm %s2, %s291
          %s294 = sshll.u32 %s283, 4
          %s295 = int_to_ptr.vmem [resolvable:$true] %s294
          %297 = dma.vmem_to_hbm [thread:$0]  %s295, 128, %s292, %s280
        $region36: #{tpu_custom_call.1} parent=27 // pred_fallthru
          _
      $region28: #{tpu_custom_call.1} parent=5 // pred_fallthru
        _
      %p298 = scmp.le.s32.totalorder 2, %s12
      // Predicated region
      $region37: #{tpu_custom_call.1} parent=5 // pred_check
        %p299 = pneg %p298
      $region38: #{tpu_custom_call.1} parent=5 // pred_check_branch
        %301 = sbr.rel (%p299) target = $region40
      $region39: #{tpu_custom_call.1} parent=5 // pred_region
        %s302 = ssub.s32 %s12, 2
        // Predicated region
        $region41: #{tpu_custom_call.1} parent=39 // pred_check
          %p303 = pneg %p104
        $region42: #{tpu_custom_call.1} parent=39 // pred_check_branch
          %305 = sbr.rel (%p303) target = $region44
        $region43: #{tpu_custom_call.1} parent=39 // pred_region
          %s306 = sand.u32 %s89, 1
          %s307 = scalar_lea.sflag [#allocation4], %s306
          %s308 = sand.u32 %s89, 1
          %s309 = smul.addr %s308, 8
          %s310 = scalar_lea.vmem [#allocation5], %s309
          %311 = dma.done %s307, 128
        $region44: #{tpu_custom_call.1} parent=39 // pred_fallthru
          _
      $region40: #{tpu_custom_call.1} parent=5 // pred_fallthru
        _
    $region6: #{tpu_custom_call.1} parent=1 // loop_footer
      %s16 = sadd.s32 1, %s12
    $region7: #{tpu_custom_call.1} parent=1 // loop_footer_branch
      %11 = sbr.rel target = $region3
    $region8: #{tpu_custom_call.1} parent=1 // loop_exit
      _
    %312 = vsyncpa [#allocation3], 1
    %s313 = scalar_lea.sflag [#allocation3], 1
    %314 = vsyncpa %s313, 1
    %315 = vsyncpa [#allocation4], 1
    %s316 = scalar_lea.sflag [#allocation4], 1
    %317 = vsyncpa %s316, 1

// kernel: tpu_custom_call.1
$region0: #{tpu_custom_call.1}
  #allocation0 [shape = 'u32[]', space=smem, size = 0x4, offset = 0x4, fixed_abs, tag = 'smem constant byte address 0x4 - core index']
  #allocation1 [shape = 'u32[144,128]{1,0:T(1,128)}', space=vmem, size = 0x12000, scoped, tag = 'internal scratch']
  %s0 = inlined_call_operand.vmem [shape: s32[2,8,1], index: 0, kind: input, shape index: {}]
  %s1 = inlined_call_operand.hbm [shape: f32[50,128], index: 1, kind: input, shape index: {}]
  %s2 = inlined_call_operand.hbm [shape: f32[2,8,128], index: 2, kind: output, shape index: {}]
  %s3 = sld [smem:[#allocation0]]
  $region45: #{tpu_custom_call.1} parent=0
    _
  %s5 = ssub.s32 1, %s3
  %s6 = scalar_select 0, %s5, %s3
  $region1: #{tpu_custom_call.1} parent=0
    #allocation2 [shape = 'u8[28672]{0}', space=vmem, size = 0x7000, scoped, tag = 'input window, operand 1, single buffered']
    #allocation3 [shape = 's32[2]{0}', space=sflag, size = 0x8, scoped, tag = 'scoped memory for tpu_custom_call.1']
    #allocation4 [shape = 's32[2]{0}', space=sflag, size = 0x8, scoped, tag = 'scoped memory for tpu_custom_call.1']
    #allocation5 [shape = 'u8[8192]{0}', space=vmem, size = 0x2000, scoped, tag = 'output window, operand 0']
    %7 = vsyncpa [#allocation3], 0
    %8 = vsyncpa [#allocation4], 0
    %s9 = scalar_lea.sflag [#allocation4], 1
    %10 = vsyncpa %s9, 0
    loop: start=0, step=1, limit=4
    $region2: #{tpu_custom_call.1} parent=1 // loop_pre_header
      _
    $region3: #{tpu_custom_call.1} parent=1 // loop_header
      %s12 = sphi 0, %s16
      %p13 = scmp.ge.s32.totalorder %s12, 4
      %s19 = sphi 0, %s31
      %s20 = sphi 0, %s27
      %s21 = sphi 0, %s19
      %s22 = sphi 0, %s20
      %s23 = sphi 0, %s21
      %s24 = sphi 0, %s22
      %s36 = sphi 0, %s38
      %s39 = sphi 0, %s36
      %s40 = sphi 0, %s39
      %s56 = sphi 0, %s40
      %s60 = sphi 0, %s60
      %s62 = sphi 0, %s60
      %s63 = sphi 0, %s62
      %s77 = sphi 0, %s63
      %s85 = sphi 0, %s87
      %s88 = sphi 0, %s85
      %s89 = sphi 0, %s88
      %s105 = sphi 0, %s89
    $region4: #{tpu_custom_call.1} parent=1 // loop_header_branch
      %15 = sbr.rel (%p13) target = $region8
    $region5: #{tpu_custom_call.1} parent=1 // loop_body
      %s17 = ssub.s32 %s12, 1
      %s18 = ssub.s32 %s12, 2
      %s25 = sadd.s32 1, %s20
      %p26 = scmp.ge.s32.totalorder %s25, 1
      %s27 = scalar_select %p26, 0, %s25
      %s28 = sadd.s32 1, %s19
      %s29 = scalar_select %p26, %s28, %s19
      %p30 = scmp.ge.s32.totalorder %s29, 2
      %s31 = scalar_select %p30, 0, %s29
      %s32 = ssub.s32 %s19, %s31
      %s33 = ssub.s32 %s20, %s27
      %s34 = sor.u32 %s32, %s33
      %p35 = scmp.eq.s32.totalorder %s34, 0
      %s37 = sadd.s32 %s36, 1
      %s38 = scalar_select %p35, %s36, %s37
      %p41 = pneg %p35
      %p42 = scmp.eq.s32.totalorder %s12, 1
      %p43 = por %p41, %p42
      %p44 = scmp.ne.s32.totalorder %s36, %s39
      %p45 = scmp.eq.s32.totalorder %s12, 0
      %p46 = por %p44, %p45
      %p47 = scmp.ne.s32.totalorder %s36, %s39
      %p48 = scmp.eq.s32.totalorder %s17, 1
      %p49 = por %p47, %p48
      %p50 = scmp.ne.s32.totalorder %s39, %s40
      %p51 = scmp.eq.s32.totalorder %s17, 0
      %p52 = por %p50, %p51
      %p53 = scmp.ne.s32.totalorder %s39, %s40
      %p54 = scmp.eq.s32.totalorder %s18, 1
      %p55 = por %p53, %p54
      %p57 = scmp.ne.s32.totalorder %s40, %s56
      %p58 = scmp.eq.s32.totalorder %s18, 0
      %p59 = por %p57, %p58
      %s61 = sadd.s32 %s60, 1
      %p64 = scmp.eq.s32.totalorder %s12, 1
      %p65 = scmp.ne.s32.totalorder %s60, %s62
      %p66 = scmp.eq.s32.totalorder %s12, 0
      %p67 = por %p65, %p66
      %p68 = scmp.ne.s32.totalorder %s60, %s62
      %p69 = scmp.eq.s32.totalorder %s17, 1
      %p70 = por %p68, %p69
      %p71 = scmp.ne.s32.totalorder %s62, %s63
      %p72 = scmp.eq.s32.totalorder %s17, 0
      %p73 = por %p71, %p72
      %p74 = scmp.ne.s32.totalorder %s62, %s63
      %p75 = scmp.eq.s32.totalorder %s18, 1
      %p76 = por %p74, %p75
      %p78 = scmp.ne.s32.totalorder %s63, %s77
      %p79 = scmp.eq.s32.totalorder %s18, 0
      %p80 = por %p78, %p79
      %s81 = ssub.s32 %s19, %s31
      %s82 = ssub.s32 %s20, %s27
      %s83 = sor.u32 %s81, %s82
      %p84 = scmp.eq.s32.totalorder %s83, 0
      %s86 = sadd.s32 %s85, 1
      %s87 = scalar_select %p84, %s85, %s86
      %p90 = pneg %p84
      %p91 = scmp.eq.s32.totalorder %s12, 1
      %p92 = por %p90, %p91
      %p93 = scmp.ne.s32.totalorder %s85, %s88
      %p94 = scmp.eq.s32.totalorder %s12, 0
      %p95 = por %p93, %p94
      %p96 = scmp.ne.s32.totalorder %s85, %s88
      %p97 = scmp.eq.s32.totalorder %s17, 1
      %p98 = por %p96, %p97
      %p99 = scmp.ne.s32.totalorder %s88, %s89
      %p100 = scmp.eq.s32.totalorder %s17, 0
      %p101 = por %p99, %p100
      %p102 = scmp.ne.s32.totalorder %s88, %s89
      %p103 = scmp.eq.s32.totalorder %s18, 1
      %p104 = por %p102, %p103
      %p106 = scmp.ne.s32.totalorder %s89, %s105
      %p107 = scmp.eq.s32.totalorder %s18, 0
      %p108 = por %p106, %p107
      %p109 = scmp.le.s32.totalorder 1, %s12
      %p110 = scmp.lt.s32.totalorder %s12, 3
      %p111 = pnand %p109, %p110
      %p112 = pneg %p111
      // Predicated region
      $region9: #{tpu_custom_call.1} parent=5 // pred_check
        _
      $region10: #{tpu_custom_call.1} parent=5 // pred_check_branch
        %114 = sbr.rel (%p111) target = $region12
      $region11: #{tpu_custom_call.1} parent=5 // pred_region
        %s115 = ssub.s32 %s12, 1
        // Predicated region
        $region13: #{tpu_custom_call.1} parent=11 // pred_check
          %p116 = pneg %p73
        $region14: #{tpu_custom_call.1} parent=11 // pred_check_branch
          %118 = sbr.rel (%p116) target = $region16
        $region15: #{tpu_custom_call.1} parent=11 // pred_region
          %s120 = ssub.s32 896, 896
          %121 = vsyncadd [#allocation3], %s120
          %s122 = sshll.u32 [#allocation2], 4
          %s123 = int_to_ptr.vmem [resolvable:$true] %s122
          %128 = dma.hbm_to_vmem [thread:$0]  %s1, 896, %s123, [#allocation3], 128, 128, 8
        $region16: #{tpu_custom_call.1} parent=11 // pred_fallthru
          _
      $region12: #{tpu_custom_call.1} parent=5 // pred_fallthru
        _
      %p129 = scmp.lt.s32.totalorder %s12, 2
      // Predicated region
      $region17: #{tpu_custom_call.1} parent=5 // pred_check
        %p130 = pneg %p129
      $region18: #{tpu_custom_call.1} parent=5 // pred_check_branch
        %132 = sbr.rel (%p130) target = $region20
      $region19: #{tpu_custom_call.1} parent=5 // pred_region
        // Predicated region
        $region21: #{tpu_custom_call.1} parent=19 // pred_check
          %p133 = pneg %p46
        $region22: #{tpu_custom_call.1} parent=19 // pred_check_branch
          %135 = sbr.rel (%p133) target = $region24
        $region23: #{tpu_custom_call.1} parent=19 // pred_region
          %p136 = scmp.lt.s32.totalorder %s19, 1
          %s137 = scalar_select %p136, %s19, 1
          %p138 = scmp.lt.s32.totalorder %s20, 0
          %s139 = scalar_select %p138, %s20, 0
          %s140 = sadd.s32 %s139, %s137
          %s141 = smul.addr %s140, 8
          %s142 = scalar_lea.vmem %s0, %s141
        $region24: #{tpu_custom_call.1} parent=19 // pred_fallthru
          _
      $region20: #{tpu_custom_call.1} parent=5 // pred_fallthru
        _
      %p143 = scmp.le.s32.totalorder 1, %s12
      %p144 = scmp.lt.s32.totalorder %s12, 3
      %p145 = pnand %p143, %p144
      %p146 = pneg %p145
      // Predicated region
      $region25: #{tpu_custom_call.1} parent=5 // pred_check
        _
      $region26: #{tpu_custom_call.1} parent=5 // pred_check_branch
        %148 = sbr.rel (%p145) target = $region28
      $region27: #{tpu_custom_call.1} parent=5 // pred_region
        %s149 = ssub.s32 %s12, 1
        // Predicated region
        $region29: #{tpu_custom_call.1} parent=27 // pred_check
          %p150 = pneg %p73
        $region30: #{tpu_custom_call.1} parent=27 // pred_check_branch
          %152 = sbr.rel (%p150) target = $region32
        $region31: #{tpu_custom_call.1} parent=27 // pred_region
          %153 = dma.done [#allocation3], 896
        $region32: #{tpu_custom_call.1} parent=27 // pred_fallthru
          _
        %p154 = scmp.lt.s32.totalorder %s21, 1
        %s155 = scalar_select %p154, %s21, 1
        %p156 = scmp.lt.s32.totalorder %s22, 0
        %s157 = scalar_select %p156, %s22, 0
        %s158 = sadd.s32 %s157, %s155
        %s159 = smul.addr %s158, 8
        %s160 = scalar_lea.vmem %s0, %s159
        %p161 = pneg %p52
        %p162 = pneg %p49
        %p163 = pneg %p73
        %p164 = pneg %p70
        %p165 = pneg %p101
        %p166 = pneg %p98
        %s167 = sand.u32 %s88, 1
        %s168 = scalar_lea.sflag [#allocation4], %s167
        %s169 = sand.u32 %s88, 1
        %s170 = smul.addr %s169, 8
        %s171 = scalar_lea.vmem [#allocation5], %s170
        %p172 = scmp.lt.s32.totalorder %s21, 1
        %s173 = scalar_select %p172, %s21, 1
        %p174 = scmp.lt.s32.totalorder %s22, 0
        %s175 = scalar_select %p174, %s22, 0
        %s176 = sadd.s32 %s175, %s173
        %s177 = smul.addr %s176, 8
        %s178 = scalar_lea.vmem %s0, %s177
        %v179 = vld [vmem:[%s178] sm:$0xff]
        %vm180 = vcmp.gt.s32.totalorder %v179, 0
        %v181 = vsel %vm180, %v179, 0
        %vm182 = vcmp.lt.s32.totalorder %v181, 49
        %v183 = vsel %vm182, %v181, 49
        %v184 = vlaneseq
        %v185 = vand.u32 %v184, 127
        %186 = vset.pattern.permute.xlu0 0
        %187 = vperm.xlu0 %186, %v183
        %v188 = vpop.permute.xlu0 %187
        %vm189 = vcmp.eq.s32.totalorder %v185, %v188
        %v190 = vsel %vm189, 1, 0
        %v191 = vcvt.s32.f32 %v190
        %v192 = vld [vmem:[#allocation2] sm:$0xff]
        %v193 = vld [vmem:[#allocation2 + $0x8] sm:$0xff]
        %v194 = vld [vmem:[#allocation2 + $0x10] sm:$0xff]
        %v195 = vld [vmem:[#allocation2 + $0x18] sm:$0xff]
        %v196 = vld [vmem:[#allocation2 + $0x20] sm:$0xff]
        %v197 = vld [vmem:[#allocation2 + $0x28] sm:$0xff]
        %v198 = vld [vmem:[#allocation2 + $0x30] sm:$0x3]
        %vm199 = vcmask 408576
        %v201 = vsel %vm199, %v191, 0
        %vm203 = vcmask 1041408
        %v205 = vsel %vm203, %v198, 0
        %207 = vmatprep.subr.mxu0 0.0
        %208 = vmatpush1.msra.mxu0 %v192
        %209 = vmatprep.subr.mxu0 0.0
        %210 = vmatpush1.msra.mxu0 %v193
        %211 = vmatprep.subr.mxu0 0.0
        %212 = vmatpush1.msra.mxu0 %v194
        %213 = vmatprep.subr.mxu0 0.0
        %214 = vmatpush1.msra.mxu0 %v195
        %215 = vmatprep.subr.mxu0 0.0
        %216 = vmatpush1.msra.mxu0 %v196
        %217 = vmatprep.subr.mxu0 0.0
        %218 = vmatpush1.msra.mxu0 %v197
        %219 = vmatprep.subr.mxu0 0.0
        %220 = vmatpush1.msra.mxu0 %v205
        %221 = vmatprep.subr.mxu0 0.0
        %222 = vmatpush1.msra.mxu0 0.0
        %223 = vmatprep.subr.mxu0 0.0
        %224 = vmatpush1.msra.mxu0 0.0
        %225 = vmatprep.subr.mxu0 0.0
        %226 = vmatpush1.msra.mxu0 0.0
        %227 = vmatprep.subr.mxu0 0.0
        %228 = vmatpush1.msra.mxu0 0.0
        %229 = vmatprep.subr.mxu0 0.0
        %230 = vmatpush1.msra.mxu0 0.0
        %231 = vmatprep.subr.mxu0 0.0
        %232 = vmatpush1.msra.mxu0 0.0
        %233 = vmatprep.subr.mxu0 0.0
        %234 = vmatpush1.msra.mxu0 0.0
        %235 = vmatprep.subr.mxu0 0.0
        %236 = vmatpush1.msra.mxu0 0.0
        %237 = vmatprep.subr.mxu0 0.0
        %238 = vmatpush1.msra.mxu0 0.0
        %239 = vmatprep.subr.mxu0 0.0
        %240 = vmatpush1.msra.mxu0 0.0
        %241 = vmatprep.subr.mxu0 0.0
        %242 = vmatpush1.msra.mxu0 0.0
        %243 = vmatprep.subr.mxu0 0.0
        %244 = vmatpush1.msra.mxu0 0.0
        %245 = vmatprep.subr.mxu0 0.0
        %246 = vmatpush1.msra.mxu0 0.0
        %247 = vmatprep.subr.mxu0 0.0
        %248 = vmatpush1.msra.mxu0 0.0
        %249 = vmatprep.subr.mxu0 0.0
        %250 = vmatpush1.msra.mxu0 0.0
        %251 = vmatprep.subr.mxu0 0.0
        %252 = vmatpush1.msra.mxu0 0.0
        %253 = vmatprep.subr.mxu0 0.0
        %254 = vmatpush1.msra.mxu0 0.0
        %255 = vmatprep.subr.mxu0 0.0
        %256 = vmatpush1.msra.mxu0 0.0
        %257 = vmatprep.subr.mxu0 0.0
        %258 = vmatpush1.msra.mxu0 0.0
        %259 = vmatprep.subr.mxu0 0.0
        %260 = vmatpush1.msra.mxu0 0.0
        %261 = vmatprep.subr.mxu0 0.0
        %262 = vmatpush1.msra.mxu0 0.0
        %263 = vmatprep.subr.mxu0 0.0
        %264 = vmatpush1.msra.mxu0 0.0
        %265 = vmatprep.subr.mxu0 0.0
        %266 = vmatpush1.msra.mxu0 0.0
        %267 = vmatprep.subr.mxu0 0.0
        %268 = vmatpush1.msra.mxu0 0.0
        %269 = vmatprep.subr.mxu0 0.0
        %270 = vmatpush1.msra.mxu0 0.0
        %271 = vmatprep.mubr.f32.mxu0 0.0
        %272 = vmatmul.mubr.f32.gmra.mrb[0].mxu0 %v201
        %v273 = vpop.f32.mrb[0].mxu0
        %v274 = vadd.f32 0.0, %v273
        %v275 = vpop.f32.mrb[0].mxu0
        %276 = vdwg.mxu0
        %v277 = vmul.f32 %v274, 5.656854
        %278 = vst [vmem:[%s171] sm:$0xff] %v277
        %s279 = sand.u32 %s88, 1
        %s280 = scalar_lea.sflag [#allocation4], %s279
        %s281 = sand.u32 %s88, 1
        %s282 = smul.addr %s281, 8
        %s283 = scalar_lea.vmem [#allocation5], %s282
        // Predicated region
        $region33: #{tpu_custom_call.1} parent=27 // pred_check
          %p284 = pneg %p98
        $region34: #{tpu_custom_call.1} parent=27 // pred_check_branch
          %286 = sbr.rel (%p284) target = $region36
        $region35: #{tpu_custom_call.1} parent=27 // pred_region
          %s288 = ssub.s32 128, 128
          %289 = vsyncadd %s280, %s288
          %s290 = sadd.s32 %s22, %s21
          %s291 = smul.addr %s290, 128
          %s292 = scalar_lea.hbm %s2, %s291
          %s294 = sshll.u32 %s283, 4
          %s295 = int_to_ptr.vmem [resolvable:$true] %s294
          %297 = dma.vmem_to_hbm [thread:$0]  %s295, 128, %s292, %s280
        $region36: #{tpu_custom_call.1} parent=27 // pred_fallthru
          _
      $region28: #{tpu_custom_call.1} parent=5 // pred_fallthru
        _
      %p298 = scmp.le.s32.totalorder 2, %s12
      // Predicated region
      $region37: #{tpu_custom_call.1} parent=5 // pred_check
        %p299 = pneg %p298
      $region38: #{tpu_custom_call.1} parent=5 // pred_check_branch
        %301 = sbr.rel (%p299) target = $region40
      $region39: #{tpu_custom_call.1} parent=5 // pred_region
        %s302 = ssub.s32 %s12, 2
        // Predicated region
        $region41: #{tpu_custom_call.1} parent=39 // pred_check
          %p303 = pneg %p104
        $region42: #{tpu_custom_call.1} parent=39 // pred_check_branch
          %305 = sbr.rel (%p303) target = $region44
        $region43: #{tpu_custom_call.1} parent=39 // pred_region
          %s306 = sand.u32 %s89, 1
          %s307 = scalar_lea.sflag [#allocation4], %s306
          %s308 = sand.u32 %s89, 1
          %s309 = smul.addr %s308, 8
          %s310 = scalar_lea.vmem [#allocation5], %s309
          %311 = dma.done %s307, 128
        $region44: #{tpu_custom_call.1} parent=39 // pred_fallthru
          _
      $region40: #{tpu_custom_call.1} parent=5 // pred_fallthru
        _
    $region6: #{tpu_custom_call.1} parent=1 // loop_footer
      %s16 = sadd.s32 1, %s12
    $region7: #{tpu_custom_call.1} parent=1 // loop_footer_branch
      %11 = sbr.rel target = $region3
    $region8: #{tpu_custom_call.1} parent=1 // loop_exit
      _
    %312 = vsyncpa [#allocation3], 1
    %s313 = scalar_lea.sflag [#allocation3], 1
    %314 = vsyncpa %s313, 1
    %315 = vsyncpa [#allocation4], 1
    %s316 = scalar_lea.sflag [#allocation4], 1
    %317 = vsyncpa %s316, 1

</llo_original>
